<compile_context>
chip_gen: v7x
topology: tpu7x:2x2x1
jax: 0.10.0
libtpu: 0.0.40
codegen_flags: <defaults>
</compile_context>

<pallas_src>
import functools

import jax
import jax.numpy as jnp
from jax.experimental import pallas as pl
from jax.experimental.pallas import tpu as pltpu

IN_FEATURES = 128
OUT_FEATURES = 384


def linear_add_relu_kernel(x1_ref, x2_ref, w_ref, b_ref, o_ref):
    # MXU matmul with f32 accumulation, then fused bias + residual + ReLU on
    # the VPU, all on the VMEM-resident tile. x2_ref may be (1, 384) and is
    # broadcast in-kernel against the (TM, 384) accumulator.
    y = jnp.dot(x1_ref[...], w_ref[...], preferred_element_type=jnp.float32)
    y = y + b_ref[...].astype(jnp.float32) + x2_ref[...].astype(jnp.float32)
    o_ref[...] = jnp.maximum(y, 0.0).astype(o_ref.dtype)


def _round_up(x, m):
    return ((x + m - 1) // m) * m


def _pick_tm(B, tm):
    if B <= 8:
        return B  # single step, block == full array (no masking needed)
    if B <= 2 * tm:
        # Split into ~2 tiles so both v7x TensorCores get work; harmless on
        # single-TC chips (just one extra cheap grid step).
        return min(tm, _round_up(pl.cdiv(B, 2), 8))
    return tm


@functools.partial(jax.jit, static_argnames=("tm",))
def linear_add_relu(x1, x2, w_t, b, *, tm=2048):
    B, K = x1.shape
    assert K == IN_FEATURES
    N = OUT_FEATURES

    x2 = jnp.asarray(x2)
    if x2.ndim == 1:
        x2 = x2[None, :]
    b = jnp.asarray(b)
    if b.ndim == 1:
        b = b[None, :]

    # x2 is either a per-row residual (B, 384) or a broadcast vector (1, 384).
    x2_per_row = (x2.shape[0] == B) and (B > 1)

    TM = _pick_tm(B, tm)
    grid = (pl.cdiv(B, TM),)

    out_dtype = jnp.result_type(x1.dtype, w_t.dtype, x2.dtype, b.dtype)

    if x2_per_row:
        x2_spec = pl.BlockSpec((TM, N), lambda i: (i, 0))       # streamed tile
    else:
        x2_spec = pl.BlockSpec((x2.shape[0], N), lambda i: (0, 0))  # resident

    cost = pl.CostEstimate(
        flops=2 * B * K * N,
        transcendentals=0,
        bytes_accessed=(
            x1.size * x1.dtype.itemsize                    # x1 read
            + x2.size * x2.dtype.itemsize                  # x2 read (true size)
            + w_t.size * w_t.dtype.itemsize                # weights (resident)
            + b.size * b.dtype.itemsize                    # bias (resident)
            + B * N * jnp.dtype(out_dtype).itemsize        # output write
        ),
    )

    return pl.pallas_call(
        linear_add_relu_kernel,
        out_shape=jax.ShapeDtypeStruct((B, N), out_dtype),
        grid=grid,
        in_specs=[
            pl.BlockSpec((TM, K), lambda i: (i, 0)),             # x1 tile
            x2_spec,                                             # x2 tile / resident
            pl.BlockSpec((K, N), lambda i: (0, 0)),              # W resident
            pl.BlockSpec((b.shape[0], N), lambda i: (0, 0)),     # bias resident
        ],
        out_specs=pl.BlockSpec((TM, N), lambda i: (i, 0)),
        compiler_params=pltpu.CompilerParams(
            # Independent batch tiles -> shard across TCs on v7x.
            dimension_semantics=("parallel",),
        ),
        cost_estimate=cost,
    )(x1, x2, w_t, b)


def reference(x1, x2, w_t, b):
    x2 = jnp.asarray(x2)
    if x2.ndim == 1:
        x2 = x2[None, :]
    return jnp.maximum(x1 @ w_t + b + x2, 0.0)


if __name__ == "__main__":
    key = jax.random.PRNGKey(0)
    k_x1, k_x2, k_w, k_b = jax.random.split(key, 4)

    # Deterministic parameter init (mimic nn.Linear's uniform(-1/sqrt(in), 1/sqrt(in)))
    bound = 1.0 / jnp.sqrt(jnp.float32(IN_FEATURES))
    w = jax.random.uniform(
        k_w, (OUT_FEATURES, IN_FEATURES), dtype=jnp.float32,
        minval=-bound, maxval=bound)
    b = jax.random.uniform(
        k_b, (1, OUT_FEATURES), dtype=jnp.float32,
        minval=-bound, maxval=bound)
    w_t = jnp.asarray(w.T)  # (128, 384) stored transposed for the kernel

    # Small-shape case matching the module semantics (batch=2, in=128 -> out=384).
    B = 2
    x1 = jax.random.normal(k_x1, (B, IN_FEATURES), dtype=jnp.float32)
    x2 = jax.random.normal(k_x2, (B, OUT_FEATURES), dtype=jnp.float32)
    out = jax.block_until_ready(linear_add_relu(x1, x2, w_t, b))
    ref = reference(x1, x2, w_t, b)
    assert out.shape == (B, OUT_FEATURES)
    assert jnp.allclose(out, ref, atol=1e-5, rtol=1e-5)

    # Broadcast-residual case: x2 is a (1, 384) vector kept VMEM-resident.
    x2v = jax.random.normal(k_x2, (1, OUT_FEATURES), dtype=jnp.float32)
    out_v = jax.block_until_ready(linear_add_relu(x1, x2v, w_t, b))
    ref_v = reference(x1, x2v, w_t, b)
    assert jnp.allclose(out_v, ref_v, atol=1e-5, rtol=1e-5)

    # Mid-size batch exercising the ragged boundary block (no pad/slice in the
    # wrapper) and the 2-tile split for v7x.
    B2 = 600
    x1b = jax.random.normal(k_x1, (B2, IN_FEATURES), dtype=jnp.float32)
    x2b = jax.random.normal(k_x2, (B2, OUT_FEATURES), dtype=jnp.float32)
    out2 = jax.block_until_ready(linear_add_relu(x1b, x2b, w_t, b))
    ref2 = reference(x1b, x2b, w_t, b)
    assert out2.shape == (B2, OUT_FEATURES)
    assert jnp.allclose(out2, ref2, atol=1e-4, rtol=1e-4)

    print("KERNEL_OK")
</pallas_src>

<mosaic_0001>
module attributes {stable_mosaic.version = 11 : i64} {
  func.func @linear_add_relu_kernel(%arg0: i32, %arg1: memref<2x128xf32, #tpu.memory_space<vmem>>, %arg2: memref<2x384xf32, #tpu.memory_space<vmem>>, %arg3: memref<128x384xf32, #tpu.memory_space<vmem>>, %arg4: memref<1x384xf32, #tpu.memory_space<vmem>>, %arg5: memref<2x384xf32, #tpu.memory_space<vmem>>) attributes {dimension_semantics = [#tpu.dimension_semantics<parallel>], iteration_bounds = array<i64: 1>, scalar_prefetch = 0 : i64, scratch_operands = 0 : i64, tpu.core_type = #tpu.core_type<tc>, window_params = [{transform_indices = @transform_0, window_bounds = array<i64: 2, 128>}, {transform_indices = @transform_1, window_bounds = array<i64: 2, 384>}, {pipeline_mode = #tpu.pipeline_mode<synchronous>, transform_indices = @transform_2, window_bounds = array<i64: 128, 384>}, {pipeline_mode = #tpu.pipeline_mode<synchronous>, transform_indices = @transform_3, window_bounds = array<i64: 1, 384>}, {transform_indices = @transform_4, window_bounds = array<i64: 2, 384>}]} {
    %c0 = arith.constant 0 : index
    %c0_0 = arith.constant 0 : index
    %0 = vector.load %arg1[%c0, %c0_0] : memref<2x128xf32, #tpu.memory_space<vmem>>, vector<2x128xf32>
    %c0_1 = arith.constant 0 : index
    %c0_2 = arith.constant 0 : index
    %1 = vector.load %arg3[%c0_1, %c0_2] : memref<128x384xf32, #tpu.memory_space<vmem>>, vector<128x384xf32>
    %cst = arith.constant dense<0.000000e+00> : vector<2x384xf32>
    %2 = tpu.matmul %0, %1, %cst {dimension_numbers = #tpu.dot_dimension_numbers<[1], [0], [0], [1], [0, 0, 1, 1], [], []>} : vector<2x128xf32>, vector<128x384xf32>, vector<2x384xf32> -> vector<2x384xf32>
    %c0_3 = arith.constant 0 : index
    %c0_4 = arith.constant 0 : index
    %3 = vector.load %arg4[%c0_3, %c0_4] : memref<1x384xf32, #tpu.memory_space<vmem>>, vector<1x384xf32>
    %4 = vector.broadcast %3 : vector<1x384xf32> to vector<2x384xf32>
    %5 = arith.addf %2, %4 : vector<2x384xf32>
    %c0_5 = arith.constant 0 : index
    %c0_6 = arith.constant 0 : index
    %6 = vector.load %arg2[%c0_5, %c0_6] : memref<2x384xf32, #tpu.memory_space<vmem>>, vector<2x384xf32>
    %7 = arith.addf %5, %6 : vector<2x384xf32>
    %cst_7 = arith.constant 0.000000e+00 : f32
    %8 = vector.broadcast %cst_7 : f32 to vector<2x384xf32>
    %9 = arith.maximumf %7, %8 : vector<2x384xf32>
    %c0_8 = arith.constant 0 : index
    %c0_9 = arith.constant 0 : index
    %10 = vector.load %arg5[%c0_8, %c0_9] : memref<2x384xf32, #tpu.memory_space<vmem>>, vector<2x384xf32>
    tpu.vector_store %arg5[%c0_8, %c0_9], %9 {strides = array<i32>} : memref<2x384xf32, #tpu.memory_space<vmem>>, vector<2x384xf32>,
    return
  }
  func.func @transform_0(%arg0: i32) -> (i32, i32) {
    %c0_i32 = arith.constant 0 : i32
    %c0_i32_0 = arith.constant 0 : i32
    return %arg0, %c0_i32 : i32, i32
  }
  func.func @transform_1(%arg0: i32) -> (i32, i32) {
    %c0_i32 = arith.constant 0 : i32
    %c0_i32_0 = arith.constant 0 : i32
    return %arg0, %c0_i32 : i32, i32
  }
  func.func @transform_2(%arg0: i32) -> (i32, i32) {
    %c0_i32 = arith.constant 0 : i32
    %c0_i32_0 = arith.constant 0 : i32
    %c0_i32_1 = arith.constant 0 : i32
    return %c0_i32, %c0_i32_0 : i32, i32
  }
  func.func @transform_3(%arg0: i32) -> (i32, i32) {
    %c0_i32 = arith.constant 0 : i32
    %c0_i32_0 = arith.constant 0 : i32
    %c0_i32_1 = arith.constant 0 : i32
    return %c0_i32, %c0_i32_0 : i32, i32
  }
  func.func @transform_4(%arg0: i32) -> (i32, i32) {
    %c0_i32 = arith.constant 0 : i32
    %c0_i32_0 = arith.constant 0 : i32
    return %arg0, %c0_i32 : i32, i32
  }
}

</mosaic_0001>

<llo_original>
// kernel: linear_add_relu.1
$region0: #{linear_add_relu.1}
  #allocation0 [shape = 'u32[]', space=smem, size = 0x4, offset = 0x4, fixed_abs, tag = 'smem constant byte address 0x4 - core index']
  #allocation1 [shape = 'u32[144,128]{1,0:T(1,128)}', space=vmem, size = 0x12000, scoped, tag = 'internal scratch']
  %s0 = inlined_call_operand.hbm [shape: f32[2,128], index: 0, kind: input, shape index: {}]
  %s1 = inlined_call_operand.hbm [shape: f32[2,384], index: 1, kind: input, shape index: {}]
  %s2 = inlined_call_operand.hbm [shape: f32[128,384], index: 2, kind: input, shape index: {}]
  %s3 = inlined_call_operand.vmem [shape: f32[1,384], index: 3, kind: input, shape index: {}]
  %s4 = inlined_call_operand.hbm [shape: f32[2,384], index: 4, kind: output, shape index: {}]
  %s5 = sld [smem:[#allocation0]]
  $region38: #{linear_add_relu.1} parent=0
    _
  %s7 = ssub.s32 1, %s5
  %s8 = scalar_select 0, %s7, %s5
  $region1: #{linear_add_relu.1} parent=0
    #allocation2 [shape = 'u8[1024]{0}', space=vmem, size = 0x400, scoped, tag = 'input window, operand 0, single buffered']
    #allocation3 [shape = 's32[1]{0}', space=sflag, size = 0x4, scoped, tag = 'scoped memory for linear_add_relu.1']
    #allocation4 [shape = 's32[1]{0}', space=sflag, size = 0x4, scoped, tag = 'scoped memory for linear_add_relu.1']
    #allocation5 [shape = 'u8[3072]{0}', space=vmem, size = 0xc00, scoped, tag = 'input window, operand 1, single buffered']
    #allocation6 [shape = 's32[1]{0}', space=sflag, size = 0x4, scoped, tag = 'scoped memory for linear_add_relu.1']
    #allocation7 [shape = 'u8[196608]{0}', space=vmem, size = 0x30000, scoped, tag = 'input window, operand 2, single buffered']
    #allocation8 [shape = 'u8[3072]{0}', space=vmem, size = 0xc00, scoped, tag = 'output window, operand 0, single buffered']
    %9 = vsyncpa [#allocation3], 0
    %10 = vsyncpa [#allocation6], 0
    %11 = vsyncpa [#allocation4], 0
    // Predicated region
    $region2: #{linear_add_relu.1} parent=1 // pred_check
      _
    $region3: #{linear_add_relu.1} parent=1 // pred_check_branch
      %13 = sbr.rel (0) target = $region5
    $region4: #{linear_add_relu.1} parent=1 // pred_region
      %s15 = ssub.s32 32, 32
      %16 = vsyncadd [#allocation3], %s15
      %s18 = sshll.u32 [#allocation2], 4
      %s19 = int_to_ptr.vmem [resolvable:$true] %s18
      %21 = dma.hbm_to_vmem [thread:$0]  %s0, 32, %s19, [#allocation3]
    $region5: #{linear_add_relu.1} parent=1 // pred_fallthru
      _
    // Predicated region
    $region6: #{linear_add_relu.1} parent=1 // pred_check
      _
    $region7: #{linear_add_relu.1} parent=1 // pred_check_branch
      %23 = sbr.rel (0) target = $region9
    $region8: #{linear_add_relu.1} parent=1 // pred_region
      %s25 = ssub.s32 96, 96
      %26 = vsyncadd [#allocation6], %s25
      %s28 = sshll.u32 [#allocation5], 4
      %s29 = int_to_ptr.vmem [resolvable:$true] %s28
      %31 = dma.hbm_to_vmem [thread:$0]  %s1, 96, %s29, [#allocation6]
    $region9: #{linear_add_relu.1} parent=1 // pred_fallthru
      _
    // Predicated region
    $region10: #{linear_add_relu.1} parent=1 // pred_check
      _
    $region11: #{linear_add_relu.1} parent=1 // pred_check_branch
      %33 = sbr.rel (0) target = $region13
    $region12: #{linear_add_relu.1} parent=1 // pred_region
      %s35 = ssub.s32 6144, 6144
      %36 = vsyncadd [#allocation6], %s35
      %s37 = sshll.u32 [#allocation7], 4
      %s38 = int_to_ptr.vmem [resolvable:$true] %s37
      %43 = dma.hbm_to_vmem [thread:$0]  %s2, 6144, %s38, [#allocation6], 384, 384, 24
    $region13: #{linear_add_relu.1} parent=1 // pred_fallthru
      _
    // Predicated region
    $region14: #{linear_add_relu.1} parent=1 // pred_check
      _
    $region15: #{linear_add_relu.1} parent=1 // pred_check_branch
      %45 = sbr.rel (0) target = $region17
    $region16: #{linear_add_relu.1} parent=1 // pred_region
      _
    $region17: #{linear_add_relu.1} parent=1 // pred_fallthru
      _
    // Predicated region
    $region18: #{linear_add_relu.1} parent=1 // pred_check
      _
    $region19: #{linear_add_relu.1} parent=1 // pred_check_branch
      %47 = sbr.rel (0) target = $region21
    $region20: #{linear_add_relu.1} parent=1 // pred_region
      %48 = dma.done [#allocation3], 32
    $region21: #{linear_add_relu.1} parent=1 // pred_fallthru
      _
    // Predicated region
    $region22: #{linear_add_relu.1} parent=1 // pred_check
      _
    $region23: #{linear_add_relu.1} parent=1 // pred_check_branch
      %50 = sbr.rel (0) target = $region25
    $region24: #{linear_add_relu.1} parent=1 // pred_region
      %51 = dma.done [#allocation6], 96
    $region25: #{linear_add_relu.1} parent=1 // pred_fallthru
      _
    // Predicated region
    $region26: #{linear_add_relu.1} parent=1 // pred_check
      _
    $region27: #{linear_add_relu.1} parent=1 // pred_check_branch
      %53 = sbr.rel (0) target = $region29
    $region28: #{linear_add_relu.1} parent=1 // pred_region
      %54 = dma.done [#allocation6], 6144
    $region29: #{linear_add_relu.1} parent=1 // pred_fallthru
      _
    %v55 = vld [vmem:[#allocation2] sm:$0x3]
    %v56 = vld [vmem:[#allocation7] sm:$0xff]
    %v57 = vld [vmem:[#allocation7 + $0x8] sm:$0xff]
    %v58 = vld [vmem:[#allocation7 + $0x10] sm:$0xff]
    %v59 = vld [vmem:[#allocation7 + $0x18] sm:$0xff]
    %v60 = vld [vmem:[#allocation7 + $0x20] sm:$0xff]
    %v61 = vld [vmem:[#allocation7 + $0x28] sm:$0xff]
    %v62 = vld [vmem:[#allocation7 + $0x30] sm:$0xff]
    %v63 = vld [vmem:[#allocation7 + $0x38] sm:$0xff]
    %v64 = vld [vmem:[#allocation7 + $0x40] sm:$0xff]
    %v65 = vld [vmem:[#allocation7 + $0x48] sm:$0xff]
    %v66 = vld [vmem:[#allocation7 + $0x50] sm:$0xff]
    %v67 = vld [vmem:[#allocation7 + $0x58] sm:$0xff]
    %v68 = vld [vmem:[#allocation7 + $0x60] sm:$0xff]
    %v69 = vld [vmem:[#allocation7 + $0x68] sm:$0xff]
    %v70 = vld [vmem:[#allocation7 + $0x70] sm:$0xff]
    %v71 = vld [vmem:[#allocation7 + $0x78] sm:$0xff]
    %v72 = vld [vmem:[#allocation7 + $0x80] sm:$0xff]
    %v73 = vld [vmem:[#allocation7 + $0x88] sm:$0xff]
    %v74 = vld [vmem:[#allocation7 + $0x90] sm:$0xff]
    %v75 = vld [vmem:[#allocation7 + $0x98] sm:$0xff]
    %v76 = vld [vmem:[#allocation7 + $0xa0] sm:$0xff]
    %v77 = vld [vmem:[#allocation7 + $0xa8] sm:$0xff]
    %v78 = vld [vmem:[#allocation7 + $0xb0] sm:$0xff]
    %v79 = vld [vmem:[#allocation7 + $0xb8] sm:$0xff]
    %v80 = vld [vmem:[#allocation7 + $0xc0] sm:$0xff]
    %v81 = vld [vmem:[#allocation7 + $0xc8] sm:$0xff]
    %v82 = vld [vmem:[#allocation7 + $0xd0] sm:$0xff]
    %v83 = vld [vmem:[#allocation7 + $0xd8] sm:$0xff]
    %v84 = vld [vmem:[#allocation7 + $0xe0] sm:$0xff]
    %v85 = vld [vmem:[#allocation7 + $0xe8] sm:$0xff]
    %v86 = vld [vmem:[#allocation7 + $0xf0] sm:$0xff]
    %v87 = vld [vmem:[#allocation7 + $0xf8] sm:$0xff]
    %v88 = vld [vmem:[#allocation7 + $0x100] sm:$0xff]
    %v89 = vld [vmem:[#allocation7 + $0x108] sm:$0xff]
    %v90 = vld [vmem:[#allocation7 + $0x110] sm:$0xff]
    %v91 = vld [vmem:[#allocation7 + $0x118] sm:$0xff]
    %v92 = vld [vmem:[#allocation7 + $0x120] sm:$0xff]
    %v93 = vld [vmem:[#allocation7 + $0x128] sm:$0xff]
    %v94 = vld [vmem:[#allocation7 + $0x130] sm:$0xff]
    %v95 = vld [vmem:[#allocation7 + $0x138] sm:$0xff]
    %v96 = vld [vmem:[#allocation7 + $0x140] sm:$0xff]
    %v97 = vld [vmem:[#allocation7 + $0x148] sm:$0xff]
    %v98 = vld [vmem:[#allocation7 + $0x150] sm:$0xff]
    %v99 = vld [vmem:[#allocation7 + $0x158] sm:$0xff]
    %v100 = vld [vmem:[#allocation7 + $0x160] sm:$0xff]
    %v101 = vld [vmem:[#allocation7 + $0x168] sm:$0xff]
    %v102 = vld [vmem:[#allocation7 + $0x170] sm:$0xff]
    %v103 = vld [vmem:[#allocation7 + $0x178] sm:$0xff]
    %v104 = vld [vmem:[%s3] sm:$0x7]
    %v106 = vlaneseq
    %v107 = vshrl.u32 %v106, 7
    %v108 = vsub.s32 0, %v107
    %v109 = vrot.slane %v104, %v108
    %v110 = vlaneseq
    %v111 = vshrl.u32 %v110, 7
    %v112 = vsub.s32 1, %v111
    %v113 = vrot.slane %v104, %v112
    %v114 = vlaneseq
    %v115 = vshrl.u32 %v114, 7
    %v116 = vsub.s32 2, %v115
    %v117 = vrot.slane %v104, %v116
    %121 = vmatprep.subr.mxu0 %v57
    %122 = vmatpush1.msra.mxu0 %v56
    %123 = vmatprep.subr.mxu0 %v60
    %124 = vmatpush1.msra.mxu0 %v59
    %125 = vmatprep.subr.mxu0 %v63
    %126 = vmatpush1.msra.mxu0 %v62
    %127 = vmatprep.subr.mxu0 %v66
    %128 = vmatpush1.msra.mxu0 %v65
    %129 = vmatprep.subr.mxu0 %v69
    %130 = vmatpush1.msra.mxu0 %v68
    %131 = vmatprep.subr.mxu0 %v72
    %132 = vmatpush1.msra.mxu0 %v71
    %133 = vmatprep.subr.mxu0 %v75
    %134 = vmatpush1.msra.mxu0 %v74
    %135 = vmatprep.subr.mxu0 %v78
    %136 = vmatpush1.msra.mxu0 %v77
    %137 = vmatprep.subr.mxu0 %v81
    %138 = vmatpush1.msra.mxu0 %v80
    %139 = vmatprep.subr.mxu0 %v84
    %140 = vmatpush1.msra.mxu0 %v83
    %141 = vmatprep.subr.mxu0 %v87
    %142 = vmatpush1.msra.mxu0 %v86
    %143 = vmatprep.subr.mxu0 %v90
    %144 = vmatpush1.msra.mxu0 %v89
    %145 = vmatprep.subr.mxu0 %v93
    %146 = vmatpush1.msra.mxu0 %v92
    %147 = vmatprep.subr.mxu0 %v96
    %148 = vmatpush1.msra.mxu0 %v95
    %149 = vmatprep.subr.mxu0 %v99
    %150 = vmatpush1.msra.mxu0 %v98
    %151 = vmatprep.subr.mxu0 %v102
    %152 = vmatpush1.msra.mxu0 %v101
    %153 = vmatprep.subr.mxu0 0.0
    %154 = vmatpush1.msra.mxu0 0.0
    %155 = vmatprep.subr.mxu0 0.0
    %156 = vmatpush1.msra.mxu0 0.0
    %157 = vmatprep.subr.mxu0 0.0
    %158 = vmatpush1.msra.mxu0 0.0
    %159 = vmatprep.subr.mxu0 0.0
    %160 = vmatpush1.msra.mxu0 0.0
    %161 = vmatprep.subr.mxu0 0.0
    %162 = vmatpush1.msra.mxu0 0.0
    %163 = vmatprep.subr.mxu0 0.0
    %164 = vmatpush1.msra.mxu0 0.0
    %165 = vmatprep.subr.mxu0 0.0
    %166 = vmatpush1.msra.mxu0 0.0
    %167 = vmatprep.subr.mxu0 0.0
    %168 = vmatpush1.msra.mxu0 0.0
    %169 = vmatprep.subr.mxu0 0.0
    %170 = vmatpush1.msra.mxu0 0.0
    %171 = vmatprep.subr.mxu0 0.0
    %172 = vmatpush1.msra.mxu0 0.0
    %173 = vmatprep.subr.mxu0 0.0
    %174 = vmatpush1.msra.mxu0 0.0
    %175 = vmatprep.subr.mxu0 0.0
    %176 = vmatpush1.msra.mxu0 0.0
    %177 = vmatprep.subr.mxu0 0.0
    %178 = vmatpush1.msra.mxu0 0.0
    %179 = vmatprep.subr.mxu0 0.0
    %180 = vmatpush1.msra.mxu0 0.0
    %181 = vmatprep.subr.mxu0 0.0
    %182 = vmatpush1.msra.mxu0 0.0
    %183 = vmatprep.subr.mxu0 0.0
    %184 = vmatpush1.msra.mxu0 0.0
    %185 = vmatprep.mubr.f32.mxu0 0.0
    %186 = vmatmul.mubr.f32.gmra.mrb[0].mxu0 %v55
    %v187 = vpop.f32.mrb[0].mxu0
    %v188 = vadd.f32 %v109, %v187
    %v189 = vpop.f32.mrb[0].mxu0
    %v190 = vadd.f32 %v113, %v189
    %191 = vdwg.mxu0
    %192 = vmatprep.subr.mxu0 0.0
    %193 = vmatpush1.msra.mxu0 %v58
    %194 = vmatprep.subr.mxu0 0.0
    %195 = vmatpush1.msra.mxu0 %v61
    %196 = vmatprep.subr.mxu0 0.0
    %197 = vmatpush1.msra.mxu0 %v64
    %198 = vmatprep.subr.mxu0 0.0
    %199 = vmatpush1.msra.mxu0 %v67
    %200 = vmatprep.subr.mxu0 0.0
    %201 = vmatpush1.msra.mxu0 %v70
    %202 = vmatprep.subr.mxu0 0.0
    %203 = vmatpush1.msra.mxu0 %v73
    %204 = vmatprep.subr.mxu0 0.0
    %205 = vmatpush1.msra.mxu0 %v76
    %206 = vmatprep.subr.mxu0 0.0
    %207 = vmatpush1.msra.mxu0 %v79
    %208 = vmatprep.subr.mxu0 0.0
    %209 = vmatpush1.msra.mxu0 %v82
    %210 = vmatprep.subr.mxu0 0.0
    %211 = vmatpush1.msra.mxu0 %v85
    %212 = vmatprep.subr.mxu0 0.0
    %213 = vmatpush1.msra.mxu0 %v88
    %214 = vmatprep.subr.mxu0 0.0
    %215 = vmatpush1.msra.mxu0 %v91
    %216 = vmatprep.subr.mxu0 0.0
    %217 = vmatpush1.msra.mxu0 %v94
    %218 = vmatprep.subr.mxu0 0.0
    %219 = vmatpush1.msra.mxu0 %v97
    %220 = vmatprep.subr.mxu0 0.0
    %221 = vmatpush1.msra.mxu0 %v100
    %222 = vmatprep.subr.mxu0 0.0
    %223 = vmatpush1.msra.mxu0 %v103
    %224 = vmatprep.subr.mxu0 0.0
    %225 = vmatpush1.msra.mxu0 0.0
    %226 = vmatprep.subr.mxu0 0.0
    %227 = vmatpush1.msra.mxu0 0.0
    %228 = vmatprep.subr.mxu0 0.0
    %229 = vmatpush1.msra.mxu0 0.0
    %230 = vmatprep.subr.mxu0 0.0
    %231 = vmatpush1.msra.mxu0 0.0
    %232 = vmatprep.subr.mxu0 0.0
    %233 = vmatpush1.msra.mxu0 0.0
    %234 = vmatprep.subr.mxu0 0.0
    %235 = vmatpush1.msra.mxu0 0.0
    %236 = vmatprep.subr.mxu0 0.0
    %237 = vmatpush1.msra.mxu0 0.0
    %238 = vmatprep.subr.mxu0 0.0
    %239 = vmatpush1.msra.mxu0 0.0
    %240 = vmatprep.subr.mxu0 0.0
    %241 = vmatpush1.msra.mxu0 0.0
    %242 = vmatprep.subr.mxu0 0.0
    %243 = vmatpush1.msra.mxu0 0.0
    %244 = vmatprep.subr.mxu0 0.0
    %245 = vmatpush1.msra.mxu0 0.0
    %246 = vmatprep.subr.mxu0 0.0
    %247 = vmatpush1.msra.mxu0 0.0
    %248 = vmatprep.subr.mxu0 0.0
    %249 = vmatpush1.msra.mxu0 0.0
    %250 = vmatprep.subr.mxu0 0.0
    %251 = vmatpush1.msra.mxu0 0.0
    %252 = vmatprep.subr.mxu0 0.0
    %253 = vmatpush1.msra.mxu0 0.0
    %254 = vmatprep.subr.mxu0 0.0
    %255 = vmatpush1.msra.mxu0 0.0
    %256 = vmatprep.mubr.f32.mxu0 0.0
    %257 = vmatmul.mubr.f32.gmra.mrb[0].mxu0 %v55
    %v258 = vpop.f32.mrb[0].mxu0
    %v259 = vadd.f32 %v117, %v258
    %v260 = vpop.f32.mrb[0].mxu0
    %261 = vdwg.mxu0
    %v262 = vld [vmem:[#allocation5] sm:$0x3f]
    %v264 = vcombine.high %v262, %v262
    %v266 = vunpack.c.l.s4 1983009808
    %v267 = vunpack.c.0.s8 %v266
    %v268 = vlaneseq
    %v269 = vshrl.u32 %v268, 7
    %v270 = vsub.s32 %v267, %v269
    %v271 = vrot.slane %v262, %v270
    %v273 = vunpack.c.l.s4 1983009808
    %v274 = vunpack.c.0.s8 %v273
    %v275 = vlaneseq
    %v276 = vshrl.u32 %v275, 7
    %v277 = vsub.s32 %v274, %v276
    %v278 = vrot.slane %v264, %v277
    %v279 = vcombine.high %v271, %v271
    %v283 = vadd.f32 %v188, %v271
    %v284 = vadd.f32 %v190, %v279
    %v285 = vadd.f32 %v259, %v278
    %v286 = vmax.f32 %v283, 0.0
    %v287 = vmax.f32 %v284, 0.0
    %v288 = vmax.f32 %v285, 0.0
    %v292 = vcombine.low %v286, %v287
    %v294 = vunpack.c.l.s4 1983009808
    %v295 = vunpack.c.0.s8 %v294
    %v296 = vlaneseq
    %v297 = vshrl.u32 %v296, 7
    %v298 = vsub.s32 %v295, %v297
    %v299 = vrot.slane %v292, %v298
    %v301 = vunpack.c.l.s4 1983009808
    %v302 = vunpack.c.0.s8 %v301
    %v303 = vlaneseq
    %v304 = vshrl.u32 %v303, 7
    %v305 = vsub.s32 %v302, %v304
    %v306 = vrot.slane %v288, %v305
    %v307 = vcombine.low %v299, %v306
    %309 = vst [vmem:[#allocation8] sm:$0x3f] %v307
    // Predicated region
    $region30: #{linear_add_relu.1} parent=1 // pred_check
      _
    $region31: #{linear_add_relu.1} parent=1 // pred_check_branch
      %311 = sbr.rel (0) target = $region33
    $region32: #{linear_add_relu.1} parent=1 // pred_region
      %s313 = ssub.s32 96, 96
      %314 = vsyncadd [#allocation4], %s313
      %s316 = sshll.u32 [#allocation8], 4
      %s317 = int_to_ptr.vmem [resolvable:$true] %s316
      %319 = dma.vmem_to_hbm [thread:$0]  %s317, 96, %s4, [#allocation4]
    $region33: #{linear_add_relu.1} parent=1 // pred_fallthru
      _
    // Predicated region
    $region34: #{linear_add_relu.1} parent=1 // pred_check
      _
    $region35: #{linear_add_relu.1} parent=1 // pred_check_branch
      %321 = sbr.rel (0) target = $region37
    $region36: #{linear_add_relu.1} parent=1 // pred_region
      %322 = dma.done [#allocation4], 96
    $region37: #{linear_add_relu.1} parent=1 // pred_fallthru
      _
    %323 = vsyncpa [#allocation3], 1
    %324 = vsyncpa [#allocation6], 1
    %325 = vsyncpa [#allocation4], 1

</llo_original>
